<compile_context>
chip_gen: v6e
topology: v6e:2x2x1
jax: 0.10.0
libtpu: 0.0.40
codegen_flags: <defaults>
</compile_context>

<pallas_src>
import jax
import jax.numpy as jnp
import numpy as np
from jax import lax
from jax.experimental import pallas as pl
from jax.experimental.pallas import tpu as pltpu

EPS = 1e-5
IN_FEATS = 48        # 3 * 4 * 4 flattened input per sample
FEAT_DIM = 16
HID_DIM = 64
NUM_CLASSES = 8


def _round_up(a, m):
    return (a + m - 1) // m * m


# ----------------------------- Pallas kernel ------------------------------

def net_kernel(xT_ref, wcT_ref, bc_ref, w3_ref, b3_ref, w4_ref, b4_ref,
               featT_ref, outT_ref):
    """Whole network for one column tile of samples (batch on the lane axis).

    xT_ref:   [48, tm]  bf16      featT_ref: [16, tm] f32
    wcT_ref:  [16, 48]  bf16      outT_ref:  [ 8, tm] f32
    w3_ref:   [64, 16]  bf16      biases:    [d, 1]   f32
    w4_ref:   [ 8, 64]  bf16
    """
    # fused conv1 -> conv2 -> BN affine (+ ReLU), weights as LHS -> lane-dense
    featT = jnp.maximum(
        jnp.dot(wcT_ref[...], xT_ref[...],
                preferred_element_type=jnp.float32) + bc_ref[...], 0.0)
    featT_ref[...] = featT
    # Linear(16, 64) + LeakyReLU(0) == ReLU
    z = jnp.maximum(
        jnp.dot(w3_ref[...], featT.astype(jnp.bfloat16),
                preferred_element_type=jnp.float32) + b3_ref[...], 0.0)
    # Linear(64, 8)
    outT_ref[...] = (
        jnp.dot(w4_ref[...], z.astype(jnp.bfloat16),
                preferred_element_type=jnp.float32) + b4_ref[...])


# ------------------------- one-time parameter fold -------------------------

def fold_params(params):
    """Fold conv1 -> conv2 -> BatchNorm(affine, inference stats) into a single
    [16, 48] weight + [16] bias (done once, in f32; weights cast to bf16)."""
    (W1, b1, W2, b2, gamma, beta, rmean, rvar, W3, b3, W4, b4) = params
    dn = ('NCHW', 'OIHW', 'NCHW')

    def affine_stack(x):           # exact conv1+conv2+BN stack (affine in x)
        y = lax.conv_general_dilated(x, W1, (2, 2), ((1, 1), (1, 1)),
                                     dimension_numbers=dn) + b1[None, :, None, None]
        y = lax.conv_general_dilated(y, W2, (2, 2), ((1, 1), (1, 1)),
                                     dimension_numbers=dn) + b2[None, :, None, None]
        inv_std = gamma / jnp.sqrt(rvar + EPS)
        y = ((y - rmean[None, :, None, None]) * inv_std[None, :, None, None]
             + beta[None, :, None, None])
        return y.reshape(x.shape[0], FEAT_DIM)

    # Evaluate the affine stack on [0, e_0, ..., e_47] to extract bias + rows.
    basis = jnp.concatenate(
        [jnp.zeros((1, IN_FEATS), jnp.float32),
         jnp.eye(IN_FEATS, dtype=jnp.float32)], axis=0
    ).reshape(IN_FEATS + 1, 3, 4, 4)
    resp = affine_stack(basis)                          # [49, 16]
    bc = resp[0]                                        # [16]
    Wc = resp[1:] - bc[None, :]                         # [48, 16]

    return (jnp.asarray(Wc.T, jnp.bfloat16),                       # [16, 48]
            bc.reshape(FEAT_DIM, 1).astype(jnp.float32),            # [16, 1]
            jnp.asarray(W3, jnp.bfloat16),                          # [64, 16]
            b3.reshape(HID_DIM, 1).astype(jnp.float32),             # [64, 1]
            jnp.asarray(W4, jnp.bfloat16),                          # [ 8, 64]
            b4.reshape(NUM_CLASSES, 1).astype(jnp.float32))         # [ 8, 1]


# ------------------------------ forward pass ------------------------------

def domain_invariant_forward(x, folded, block_cols=16384):
    """x: [B, 3, 4, 4] NCHW f32.  folded: output of fold_params(params)."""
    WcT, bc, W3, b3, W4, b4 = folded
    B = x.shape[0]

    # Batch lives on the lane axis: pad to a multiple of 128 lanes and choose
    # a column tile.  block_cols=16384 keeps the double-buffered working set
    # ~6 MiB (fits v5e's 16 MiB scoped-VMEM default; v6e/v7x have headroom).
    # Force >=4 grid steps once there is more than one lane-tile of batch so
    # v7x's two TensorCores both get work on the "parallel" axis.
    Bp0 = _round_up(B, 128)
    nb = 1 if Bp0 <= 128 else max(4, pl.cdiv(Bp0, block_cols))
    tm = _round_up(pl.cdiv(Bp0, nb), 128)
    nb = pl.cdiv(Bp0, tm)
    Bp = nb * tm

    # Layout plumbing (XLA side): flatten, cast to bf16, pad batch, transpose
    # so the kernel sees a lane-dense [48, Bp] slab.
    xT = jnp.pad(x.reshape(B, IN_FEATS).astype(jnp.bfloat16),
                 ((0, Bp - B), (0, 0))).T                       # [48, Bp]

    def col_spec(rows):
        return pl.BlockSpec((rows, tm), lambda i: (0, i))

    def resident(r, c):
        # same block every grid step -> stays VMEM-resident, no re-DMA
        return pl.BlockSpec((r, c), lambda i: (0, 0))

    featT, outT = pl.pallas_call(
        net_kernel,
        out_shape=(jax.ShapeDtypeStruct((FEAT_DIM, Bp), jnp.float32),
                   jax.ShapeDtypeStruct((NUM_CLASSES, Bp), jnp.float32)),
        grid=(nb,),
        in_specs=[
            col_spec(IN_FEATS),                      # x^T tile   [48, tm]
            resident(FEAT_DIM, IN_FEATS),            # Wc^T       [16, 48]
            resident(FEAT_DIM, 1),                   # bc         [16, 1]
            resident(HID_DIM, FEAT_DIM),             # W3         [64, 16]
            resident(HID_DIM, 1),                    # b3         [64, 1]
            resident(NUM_CLASSES, HID_DIM),          # W4         [ 8, 64]
            resident(NUM_CLASSES, 1),                # b4         [ 8, 1]
        ],
        out_specs=(col_spec(FEAT_DIM), col_spec(NUM_CLASSES)),
        compiler_params=pltpu.CompilerParams(
            dimension_semantics=("parallel",)),      # shard batch across TCs
    )(xT, WcT, bc, W3, b3, W4, b4)

    # Back to the module's [B, 16] / [B, 8] convention (drop lane padding).
    feat = featT[:, :B].T
    out = outT[:, :B].T
    return feat, out


# --------------------------- pure-JAX reference ----------------------------

def ref_forward(x, params):
    (W1, b1, W2, b2, gamma, beta, rmean, rvar, W3, b3, W4, b4) = params
    dn = ('NCHW', 'OIHW', 'NCHW')
    y = lax.conv_general_dilated(x, W1, (2, 2), ((1, 1), (1, 1)),
                                 dimension_numbers=dn) + b1[None, :, None, None]
    y = lax.conv_general_dilated(y, W2, (2, 2), ((1, 1), (1, 1)),
                                 dimension_numbers=dn) + b2[None, :, None, None]
    y = (gamma[None, :, None, None] * (y - rmean[None, :, None, None])
         / jnp.sqrt(rvar + EPS)[None, :, None, None] + beta[None, :, None, None])
    y = jnp.maximum(y, 0.0)
    feat = y.reshape(x.shape[0], -1)
    h = jnp.maximum(feat @ W3.T + b3, 0.0)
    out = h @ W4.T + b4
    return feat, out


# ------------------------------ param init --------------------------------

def init_params(key):
    ks = jax.random.split(key, 8)
    W1 = jax.random.normal(ks[0], (8, 3, 4, 4), jnp.float32) * 0.1
    b1 = jax.random.normal(ks[1], (8,), jnp.float32) * 0.1
    W2 = jax.random.normal(ks[2], (16, 8, 4, 4), jnp.float32) * 0.1
    b2 = jax.random.normal(ks[3], (16,), jnp.float32) * 0.1
    gamma = jnp.ones((16,), jnp.float32)      # BatchNorm2d default init
    beta = jnp.zeros((16,), jnp.float32)
    rmean = jnp.zeros((16,), jnp.float32)
    rvar = jnp.ones((16,), jnp.float32)
    W3 = jax.random.normal(ks[4], (64, 16), jnp.float32) * 0.1   # torch [out, in]
    b3 = jax.random.normal(ks[5], (64,), jnp.float32) * 0.1
    W4 = jax.random.normal(ks[6], (8, 64), jnp.float32) * 0.1
    b4 = jax.random.normal(ks[7], (8,), jnp.float32) * 0.1
    return (W1, b1, W2, b2, gamma, beta, rmean, rvar, W3, b3, W4, b4)


if __name__ == "__main__":
    key = jax.random.PRNGKey(0)
    kx, kp = jax.random.split(key)
    x = jax.random.normal(kx, (2, 3, 4, 4), jnp.float32)   # NCHW
    params = init_params(kp)

    folded = fold_params(params)                 # one-time parameter prep
    fwd = jax.jit(domain_invariant_forward)

    feat, out = fwd(x, folded)
    jax.block_until_ready((feat, out))

    rfeat, rout = ref_forward(x, params)
    # bf16 inputs/weights (f32 accumulation) -> loosened tolerance vs f32 ref.
    np.testing.assert_allclose(np.asarray(feat), np.asarray(rfeat),
                               rtol=2e-2, atol=2e-2)
    np.testing.assert_allclose(np.asarray(out), np.asarray(rout),
                               rtol=2e-2, atol=2e-2)
    print("KERNEL_OK")
</pallas_src>

<mosaic_0001>
module attributes {stable_mosaic.version = 11 : i64} {
  func.func @net_kernel(%arg0: i32, %arg1: memref<48x128xbf16, #tpu.memory_space<vmem>>, %arg2: memref<16x48xbf16, #tpu.memory_space<vmem>>, %arg3: memref<16x1xf32, #tpu.memory_space<vmem>>, %arg4: memref<64x16xbf16, #tpu.memory_space<vmem>>, %arg5: memref<64x1xf32, #tpu.memory_space<vmem>>, %arg6: memref<8x64xbf16, #tpu.memory_space<vmem>>, %arg7: memref<8x1xf32, #tpu.memory_space<vmem>>, %arg8: memref<16x128xf32, #tpu.memory_space<vmem>>, %arg9: memref<8x128xf32, #tpu.memory_space<vmem>>) attributes {dimension_semantics = [#tpu.dimension_semantics<parallel>], iteration_bounds = array<i64: 1>, scalar_prefetch = 0 : i64, scratch_operands = 0 : i64, tpu.core_type = #tpu.core_type<tc>, window_params = [{transform_indices = @transform_0, window_bounds = array<i64: 48, 128>}, {pipeline_mode = #tpu.pipeline_mode<synchronous>, transform_indices = @transform_1, window_bounds = array<i64: 16, 48>}, {pipeline_mode = #tpu.pipeline_mode<synchronous>, transform_indices = @transform_2, window_bounds = array<i64: 16, 1>}, {pipeline_mode = #tpu.pipeline_mode<synchronous>, transform_indices = @transform_3, window_bounds = array<i64: 64, 16>}, {pipeline_mode = #tpu.pipeline_mode<synchronous>, transform_indices = @transform_4, window_bounds = array<i64: 64, 1>}, {pipeline_mode = #tpu.pipeline_mode<synchronous>, transform_indices = @transform_5, window_bounds = array<i64: 8, 64>}, {pipeline_mode = #tpu.pipeline_mode<synchronous>, transform_indices = @transform_6, window_bounds = array<i64: 8, 1>}, {transform_indices = @transform_7, window_bounds = array<i64: 16, 128>}, {transform_indices = @transform_8, window_bounds = array<i64: 8, 128>}]} {
    %c0 = arith.constant 0 : index
    %c0_0 = arith.constant 0 : index
    %0 = vector.load %arg2[%c0, %c0_0] : memref<16x48xbf16, #tpu.memory_space<vmem>>, vector<16x48xbf16>
    %c0_1 = arith.constant 0 : index
    %c0_2 = arith.constant 0 : index
    %1 = vector.load %arg1[%c0_1, %c0_2] : memref<48x128xbf16, #tpu.memory_space<vmem>>, vector<48x128xbf16>
    %cst = arith.constant dense<0.000000e+00> : vector<16x128xf32>
    %2 = tpu.matmul %0, %1, %cst {dimension_numbers = #tpu.dot_dimension_numbers<[1], [0], [0], [1], [0, 0, 1, 1], [], []>} : vector<16x48xbf16>, vector<48x128xbf16>, vector<16x128xf32> -> vector<16x128xf32>
    %c0_3 = arith.constant 0 : index
    %c0_4 = arith.constant 0 : index
    %3 = vector.load %arg3[%c0_3, %c0_4] : memref<16x1xf32, #tpu.memory_space<vmem>>, vector<16x1xf32>
    %4 = vector.broadcast %3 : vector<16x1xf32> to vector<16x128xf32>
    %5 = arith.addf %2, %4 : vector<16x128xf32>
    %cst_5 = arith.constant 0.000000e+00 : f32
    %6 = vector.broadcast %cst_5 : f32 to vector<16x128xf32>
    %7 = arith.maximumf %5, %6 : vector<16x128xf32>
    %c0_6 = arith.constant 0 : index
    %c0_7 = arith.constant 0 : index
    %8 = vector.load %arg8[%c0_6, %c0_7] : memref<16x128xf32, #tpu.memory_space<vmem>>, vector<16x128xf32>
    tpu.vector_store %arg8[%c0_6, %c0_7], %7 {strides = array<i32>} : memref<16x128xf32, #tpu.memory_space<vmem>>, vector<16x128xf32>,
    %c0_8 = arith.constant 0 : index
    %c0_9 = arith.constant 0 : index
    %9 = vector.load %arg4[%c0_8, %c0_9] : memref<64x16xbf16, #tpu.memory_space<vmem>>, vector<64x16xbf16>
    %10 = arith.truncf %7 : vector<16x128xf32> to vector<16x128xbf16>
    %cst_10 = arith.constant dense<0.000000e+00> : vector<64x128xf32>
    %11 = tpu.matmul %9, %10, %cst_10 {dimension_numbers = #tpu.dot_dimension_numbers<[1], [0], [0], [1], [0, 0, 1, 1], [], []>} : vector<64x16xbf16>, vector<16x128xbf16>, vector<64x128xf32> -> vector<64x128xf32>
    %c0_11 = arith.constant 0 : index
    %c0_12 = arith.constant 0 : index
    %12 = vector.load %arg5[%c0_11, %c0_12] : memref<64x1xf32, #tpu.memory_space<vmem>>, vector<64x1xf32>
    %13 = vector.broadcast %12 : vector<64x1xf32> to vector<64x128xf32>
    %14 = arith.addf %11, %13 : vector<64x128xf32>
    %cst_13 = arith.constant 0.000000e+00 : f32
    %15 = vector.broadcast %cst_13 : f32 to vector<64x128xf32>
    %16 = arith.maximumf %14, %15 : vector<64x128xf32>
    %c0_14 = arith.constant 0 : index
    %c0_15 = arith.constant 0 : index
    %17 = vector.load %arg6[%c0_14, %c0_15] : memref<8x64xbf16, #tpu.memory_space<vmem>>, vector<8x64xbf16>
    %18 = arith.truncf %16 : vector<64x128xf32> to vector<64x128xbf16>
    %cst_16 = arith.constant dense<0.000000e+00> : vector<8x128xf32>
    %19 = tpu.matmul %17, %18, %cst_16 {dimension_numbers = #tpu.dot_dimension_numbers<[1], [0], [0], [1], [0, 0, 1, 1], [], []>} : vector<8x64xbf16>, vector<64x128xbf16>, vector<8x128xf32> -> vector<8x128xf32>
    %c0_17 = arith.constant 0 : index
    %c0_18 = arith.constant 0 : index
    %20 = vector.load %arg7[%c0_17, %c0_18] : memref<8x1xf32, #tpu.memory_space<vmem>>, vector<8x1xf32>
    %21 = vector.broadcast %20 : vector<8x1xf32> to vector<8x128xf32>
    %22 = arith.addf %19, %21 : vector<8x128xf32>
    %c0_19 = arith.constant 0 : index
    %c0_20 = arith.constant 0 : index
    %23 = vector.load %arg9[%c0_19, %c0_20] : memref<8x128xf32, #tpu.memory_space<vmem>>, vector<8x128xf32>
    tpu.vector_store %arg9[%c0_19, %c0_20], %22 {strides = array<i32>} : memref<8x128xf32, #tpu.memory_space<vmem>>, vector<8x128xf32>,
    return
  }
  func.func @transform_0(%arg0: i32) -> (i32, i32) {
    %c0_i32 = arith.constant 0 : i32
    %c0_i32_0 = arith.constant 0 : i32
    return %c0_i32, %arg0 : i32, i32
  }
  func.func @transform_1(%arg0: i32) -> (i32, i32) {
    %c0_i32 = arith.constant 0 : i32
    %c0_i32_0 = arith.constant 0 : i32
    %c0_i32_1 = arith.constant 0 : i32
    return %c0_i32, %c0_i32_0 : i32, i32
  }
  func.func @transform_2(%arg0: i32) -> (i32, i32) {
    %c0_i32 = arith.constant 0 : i32
    %c0_i32_0 = arith.constant 0 : i32
    %c0_i32_1 = arith.constant 0 : i32
    return %c0_i32, %c0_i32_0 : i32, i32
  }
  func.func @transform_3(%arg0: i32) -> (i32, i32) {
    %c0_i32 = arith.constant 0 : i32
    %c0_i32_0 = arith.constant 0 : i32
    %c0_i32_1 = arith.constant 0 : i32
    return %c0_i32, %c0_i32_0 : i32, i32
  }
  func.func @transform_4(%arg0: i32) -> (i32, i32) {
    %c0_i32 = arith.constant 0 : i32
    %c0_i32_0 = arith.constant 0 : i32
    %c0_i32_1 = arith.constant 0 : i32
    return %c0_i32, %c0_i32_0 : i32, i32
  }
  func.func @transform_5(%arg0: i32) -> (i32, i32) {
    %c0_i32 = arith.constant 0 : i32
    %c0_i32_0 = arith.constant 0 : i32
    %c0_i32_1 = arith.constant 0 : i32
    return %c0_i32, %c0_i32_0 : i32, i32
  }
  func.func @transform_6(%arg0: i32) -> (i32, i32) {
    %c0_i32 = arith.constant 0 : i32
    %c0_i32_0 = arith.constant 0 : i32
    %c0_i32_1 = arith.constant 0 : i32
    return %c0_i32, %c0_i32_0 : i32, i32
  }
  func.func @transform_7(%arg0: i32) -> (i32, i32) {
    %c0_i32 = arith.constant 0 : i32
    %c0_i32_0 = arith.constant 0 : i32
    return %c0_i32, %arg0 : i32, i32
  }
  func.func @transform_8(%arg0: i32) -> (i32, i32) {
    %c0_i32 = arith.constant 0 : i32
    %c0_i32_0 = arith.constant 0 : i32
    return %c0_i32, %arg0 : i32, i32
  }
}

</mosaic_0001>

<llo_original>
// kernel: domain_invariant_forward.1
$region0: #{domain_invariant_forward.1}
  #allocation0 [shape = 'u32[]', space=smem, size = 0x4, offset = 0x4, fixed_abs, tag = 'smem constant byte address 0x4 - core index']
  #allocation1 [shape = 'u32[144,128]{1,0:T(1,128)}', space=vmem, size = 0x12000, scoped, tag = 'internal scratch']
  %s0 = inlined_call_operand.vmem [shape: bf16[48,128], index: 0, kind: input, shape index: {}]
  %s1 = inlined_call_operand.vmem [shape: bf16[16,48], index: 1, kind: input, shape index: {}]
  %s2 = inlined_call_operand.vmem [shape: f32[16,1], index: 2, kind: input, shape index: {}]
  %s3 = inlined_call_operand.vmem [shape: bf16[64,16], index: 3, kind: input, shape index: {}]
  %s4 = inlined_call_operand.vmem [shape: f32[64,1], index: 4, kind: input, shape index: {}]
  %s5 = inlined_call_operand.vmem [shape: bf16[8,64], index: 5, kind: input, shape index: {}]
  %s6 = inlined_call_operand.vmem [shape: f32[8,1], index: 6, kind: input, shape index: {}]
  %s7 = inlined_call_operand.vmem [shape: f32[16,128], index: 7, kind: output, shape index: {0}]
  %s8 = inlined_call_operand.vmem [shape: f32[8,128], index: 8, kind: output, shape index: {1}]
  %9 = xla_tuple %s7, %s8
  %s10 = sld [smem:[#allocation0]]
  $region46: #{domain_invariant_forward.1} parent=0
    _
  %s12 = ssub.s32 1, %s10
  %s13 = scalar_select 0, %s12, %s10
  // Predicated region
  $region2: #{domain_invariant_forward.1} parent=0 // pred_check
    _
  $region3: #{domain_invariant_forward.1} parent=0 // pred_check_branch
    %15 = sbr.rel (0) target = $region5
  $region4: #{domain_invariant_forward.1} parent=0 // pred_region
    _
  $region5: #{domain_invariant_forward.1} parent=0 // pred_fallthru
    _
  // Predicated region
  $region6: #{domain_invariant_forward.1} parent=0 // pred_check
    _
  $region7: #{domain_invariant_forward.1} parent=0 // pred_check_branch
    %17 = sbr.rel (0) target = $region9
  $region8: #{domain_invariant_forward.1} parent=0 // pred_region
    _
  $region9: #{domain_invariant_forward.1} parent=0 // pred_fallthru
    _
  // Predicated region
  $region10: #{domain_invariant_forward.1} parent=0 // pred_check
    _
  $region11: #{domain_invariant_forward.1} parent=0 // pred_check_branch
    %19 = sbr.rel (0) target = $region13
  $region12: #{domain_invariant_forward.1} parent=0 // pred_region
    _
  $region13: #{domain_invariant_forward.1} parent=0 // pred_fallthru
    _
  // Predicated region
  $region14: #{domain_invariant_forward.1} parent=0 // pred_check
    _
  $region15: #{domain_invariant_forward.1} parent=0 // pred_check_branch
    %21 = sbr.rel (0) target = $region17
  $region16: #{domain_invariant_forward.1} parent=0 // pred_region
    _
  $region17: #{domain_invariant_forward.1} parent=0 // pred_fallthru
    _
  // Predicated region
  $region18: #{domain_invariant_forward.1} parent=0 // pred_check
    _
  $region19: #{domain_invariant_forward.1} parent=0 // pred_check_branch
    %23 = sbr.rel (0) target = $region21
  $region20: #{domain_invariant_forward.1} parent=0 // pred_region
    _
  $region21: #{domain_invariant_forward.1} parent=0 // pred_fallthru
    _
  // Predicated region
  $region22: #{domain_invariant_forward.1} parent=0 // pred_check
    _
  $region23: #{domain_invariant_forward.1} parent=0 // pred_check_branch
    %25 = sbr.rel (0) target = $region25
  $region24: #{domain_invariant_forward.1} parent=0 // pred_region
    _
  $region25: #{domain_invariant_forward.1} parent=0 // pred_fallthru
    _
  // Predicated region
  $region26: #{domain_invariant_forward.1} parent=0 // pred_check
    _
  $region27: #{domain_invariant_forward.1} parent=0 // pred_check_branch
    %27 = sbr.rel (0) target = $region29
  $region28: #{domain_invariant_forward.1} parent=0 // pred_region
    _
  $region29: #{domain_invariant_forward.1} parent=0 // pred_fallthru
    _
  %v29 = vld [vmem:[%s1] sm:$0xf]
  %v30 = vld [vmem:[%s1 + $0x4] sm:$0xf]
  %v31 = vld [vmem:[%s0] sm:$0xf]
  %v32 = vld [vmem:[%s0 + $0x4] sm:$0xf]
  %v33 = vld [vmem:[%s0 + $0x8] sm:$0xf]
  %v34 = vld [vmem:[%s0 + $0xc] sm:$0xf]
  %v35 = vld [vmem:[%s0 + $0x10] sm:$0xf]
  %v36 = vld [vmem:[%s0 + $0x14] sm:$0xf]
  %v37 = vld [vmem:[%s2] sm:$0xff]
  %v38 = vld [vmem:[%s2 + $0x8] sm:$0xff]
  %40 = vset.pattern.permute.xlu0 0
  %41 = vperm.xlu0 %40, %v37
  %v42 = vpop.permute.xlu0 %41
  %45 = vset.pattern.permute.xlu0 0
  %46 = vperm.xlu0 %45, %v38
  %v47 = vpop.permute.xlu0 %46
  %v51 = vunpack.c.l.b16 %v29
  %v52 = vunpack.c.l.b16 %v30
  %v53 = vpack.c.b16 %v52, %v51
  %v60 = vunpack.c.l.b16 %v31
  %v61 = vunpack.c.l.b16 %v32
  %v62 = vunpack.c.l.b16 %v33
  %v63 = vunpack.c.l.b16 %v34
  %v64 = vunpack.c.l.b16 %v35
  %v65 = vunpack.c.l.b16 %v36
  %v66 = vpack.c.b16 %v61, %v60
  %v67 = vpack.c.b16 %v63, %v62
  %v68 = vpack.c.b16 %v65, %v64
  %vm72 = vcmask 392192
  %v74 = vsel %vm72, %v53, 0
  %76 = vmatprep.subr.bf16.mxu0 0
  %77 = vmatpush1.bf16.msra.mxu0 0
  %78 = vmatprep.subr.bf16.mxu0 0
  %79 = vmatpush1.bf16.msra.mxu0 0
  %80 = vmatprep.subr.bf16.mxu0 0
  %81 = vmatpush1.bf16.msra.mxu0 0
  %82 = vmatprep.subr.bf16.mxu0 0
  %83 = vmatpush1.bf16.msra.mxu0 0
  %84 = vmatprep.subr.bf16.mxu0 0
  %85 = vmatpush1.bf16.msra.mxu0 0
  %86 = vmatprep.subr.bf16.mxu0 0
  %87 = vmatpush1.bf16.msra.mxu0 %v68
  %88 = vmatprep.subr.bf16.mxu0 0
  %89 = vmatpush1.bf16.msra.mxu0 %v67
  %90 = vmatprep.subr.bf16.mxu0 0
  %91 = vmatpush1.bf16.msra.mxu0 %v66
  %92 = vmatprep.subr.bf16.mxu0 0
  %93 = vmatpush2.bf16.msra.mxu0 0
  %94 = vmatprep.subr.bf16.mxu0 0
  %95 = vmatpush2.bf16.msra.mxu0 0
  %96 = vmatprep.subr.bf16.mxu0 0
  %97 = vmatpush2.bf16.msra.mxu0 0
  %98 = vmatprep.subr.bf16.mxu0 0
  %99 = vmatpush2.bf16.msra.mxu0 0
  %100 = vmatprep.subr.bf16.mxu0 0
  %101 = vmatpush2.bf16.msra.mxu0 0
  %102 = vmatprep.subr.bf16.mxu0 0
  %103 = vmatpush2.bf16.msra.mxu0 0
  %104 = vmatprep.subr.bf16.mxu0 0
  %105 = vmatpush2.bf16.msra.mxu0 0
  %106 = vmatprep.subr.bf16.mxu0 0
  %107 = vmatpush2.bf16.msra.mxu0 0
  %108 = vmatprep.mubr.bf16.mxu0 0
  %109 = vmatmul.mubr.bf16.gmra.mxu0 %v74
  %v110 = vpop.f32.mrf.mxu0
  %v111 = vadd.f32 %v42, %v110
  %v112 = vpop.f32.mrf.mxu0
  %v113 = vpop.f32.mrf.mxu0
  %v114 = vadd.f32 %v47, %v113
  %v115 = vpop.f32.mrf.mxu0
  %116 = vdwg.mxu0
  %v117 = vmax.f32 %v111, 0.0
  %v118 = vmax.f32 %v114, 0.0
  %119 = vst [vmem:[%s7] sm:$0xff] %v117
  %120 = vst [vmem:[%s7 + $0x8] sm:$0xff] %v118
  %v121 = vld [vmem:[%s3] sm:$0xf]
  %v122 = vld [vmem:[%s3 + $0x4] sm:$0xf]
  %v123 = vld [vmem:[%s3 + $0x8] sm:$0xf]
  %v124 = vld [vmem:[%s3 + $0xc] sm:$0xf]
  %v125 = vld [vmem:[%s3 + $0x10] sm:$0xf]
  %v126 = vld [vmem:[%s3 + $0x14] sm:$0xf]
  %v127 = vld [vmem:[%s3 + $0x18] sm:$0xf]
  %v128 = vld [vmem:[%s3 + $0x1c] sm:$0xf]
  %v129 = vpack.c.bf16 %v118, %v117
  %v130 = vld [vmem:[%s4] sm:$0xff]
  %v131 = vld [vmem:[%s4 + $0x8] sm:$0xff]
  %v132 = vld [vmem:[%s4 + $0x10] sm:$0xff]
  %v133 = vld [vmem:[%s4 + $0x18] sm:$0xff]
  %v134 = vld [vmem:[%s4 + $0x20] sm:$0xff]
  %v135 = vld [vmem:[%s4 + $0x28] sm:$0xff]
  %v136 = vld [vmem:[%s4 + $0x30] sm:$0xff]
  %v137 = vld [vmem:[%s4 + $0x38] sm:$0xff]
  %139 = vset.pattern.permute.xlu0 0
  %140 = vperm.xlu0 %139, %v130
  %v141 = vpop.permute.xlu0 %140
  %144 = vset.pattern.permute.xlu0 0
  %145 = vperm.xlu0 %144, %v131
  %v146 = vpop.permute.xlu0 %145
  %149 = vset.pattern.permute.xlu0 0
  %150 = vperm.xlu0 %149, %v132
  %v151 = vpop.permute.xlu0 %150
  %154 = vset.pattern.permute.xlu0 0
  %155 = vperm.xlu0 %154, %v133
  %v156 = vpop.permute.xlu0 %155
  %159 = vset.pattern.permute.xlu0 0
  %160 = vperm.xlu0 %159, %v134
  %v161 = vpop.permute.xlu0 %160
  %164 = vset.pattern.permute.xlu0 0
  %165 = vperm.xlu0 %164, %v135
  %v166 = vpop.permute.xlu0 %165
  %169 = vset.pattern.permute.xlu0 0
  %170 = vperm.xlu0 %169, %v136
  %v171 = vpop.permute.xlu0 %170
  %174 = vset.pattern.permute.xlu0 0
  %175 = vperm.xlu0 %174, %v137
  %v176 = vpop.permute.xlu0 %175
  %v186 = vunpack.c.l.b16 %v121
  %v187 = vunpack.c.l.b16 %v122
  %v188 = vunpack.c.l.b16 %v123
  %v189 = vunpack.c.l.b16 %v124
  %v190 = vunpack.c.l.b16 %v125
  %v191 = vunpack.c.l.b16 %v126
  %v192 = vunpack.c.l.b16 %v127
  %v193 = vunpack.c.l.b16 %v128
  %v194 = vpack.c.b16 %v187, %v186
  %v195 = vpack.c.b16 %v189, %v188
  %v196 = vpack.c.b16 %v191, %v190
  %v197 = vpack.c.b16 %v193, %v192
  %vm198 = vcmask 130048
  %v200 = vsel %vm198, %v194, 0
  %v203 = vsel %vm198, %v195, 0
  %v206 = vsel %vm198, %v196, 0
  %v209 = vsel %vm198, %v197, 0
  %211 = vmatprep.subr.bf16.mxu0 0
  %212 = vmatpush1.bf16.msra.mxu0 0
  %213 = vmatprep.subr.bf16.mxu0 0
  %214 = vmatpush1.bf16.msra.mxu0 0
  %215 = vmatprep.subr.bf16.mxu0 0
  %216 = vmatpush1.bf16.msra.mxu0 0
  %217 = vmatprep.subr.bf16.mxu0 0
  %218 = vmatpush1.bf16.msra.mxu0 0
  %219 = vmatprep.subr.bf16.mxu0 0
  %220 = vmatpush1.bf16.msra.mxu0 0
  %221 = vmatprep.subr.bf16.mxu0 0
  %222 = vmatpush1.bf16.msra.mxu0 0
  %223 = vmatprep.subr.bf16.mxu0 0
  %224 = vmatpush1.bf16.msra.mxu0 0
  %225 = vmatprep.subr.bf16.mxu0 0
  %226 = vmatpush1.bf16.msra.mxu0 %v129
  %227 = vmatprep.subr.bf16.mxu0 0
  %228 = vmatpush2.bf16.msra.mxu0 0
  %229 = vmatprep.subr.bf16.mxu0 0
  %230 = vmatpush2.bf16.msra.mxu0 0
  %231 = vmatprep.subr.bf16.mxu0 0
  %232 = vmatpush2.bf16.msra.mxu0 0
  %233 = vmatprep.subr.bf16.mxu0 0
  %234 = vmatpush2.bf16.msra.mxu0 0
  %235 = vmatprep.subr.bf16.mxu0 0
  %236 = vmatpush2.bf16.msra.mxu0 0
  %237 = vmatprep.subr.bf16.mxu0 0
  %238 = vmatpush2.bf16.msra.mxu0 0
  %239 = vmatprep.subr.bf16.mxu0 0
  %240 = vmatpush2.bf16.msra.mxu0 0
  %241 = vmatprep.subr.bf16.mxu0 0
  %242 = vmatpush2.bf16.msra.mxu0 0
  %243 = vmatprep.mubr.bf16.mxu0 0
  %244 = vmatmul.mubr.bf16.gmra.mxu0 %v200
  %v245 = vpop.f32.mrf.mxu0
  %v246 = vadd.f32 %v141, %v245
  %v247 = vpop.f32.mrf.mxu0
  %v248 = vpop.f32.mrf.mxu0
  %v249 = vadd.f32 %v146, %v248
  %v250 = vpop.f32.mrf.mxu0
  %251 = vmatprep.mubr.bf16.mxu0 0
  %252 = vmatmul.mubr.bf16.gmra.mxu0 %v203
  %v253 = vpop.f32.mrf.mxu0
  %v254 = vadd.f32 %v151, %v253
  %v255 = vpop.f32.mrf.mxu0
  %v256 = vpop.f32.mrf.mxu0
  %v257 = vadd.f32 %v156, %v256
  %v258 = vpop.f32.mrf.mxu0
  %259 = vmatprep.mubr.bf16.mxu0 0
  %260 = vmatmul.mubr.bf16.gmra.mxu0 %v206
  %v261 = vpop.f32.mrf.mxu0
  %v262 = vadd.f32 %v161, %v261
  %v263 = vpop.f32.mrf.mxu0
  %v264 = vpop.f32.mrf.mxu0
  %v265 = vadd.f32 %v166, %v264
  %v266 = vpop.f32.mrf.mxu0
  %267 = vmatprep.mubr.bf16.mxu0 0
  %268 = vmatmul.mubr.bf16.gmra.mxu0 %v209
  %v269 = vpop.f32.mrf.mxu0
  %v270 = vadd.f32 %v171, %v269
  %v271 = vpop.f32.mrf.mxu0
  %v272 = vpop.f32.mrf.mxu0
  %v273 = vadd.f32 %v176, %v272
  %v274 = vpop.f32.mrf.mxu0
  %275 = vdwg.mxu0
  %v276 = vmax.f32 %v246, 0.0
  %v277 = vmax.f32 %v249, 0.0
  %v278 = vmax.f32 %v254, 0.0
  %v279 = vmax.f32 %v257, 0.0
  %v280 = vmax.f32 %v262, 0.0
  %v281 = vmax.f32 %v265, 0.0
  %v282 = vmax.f32 %v270, 0.0
  %v283 = vmax.f32 %v273, 0.0
  %v284 = vld [vmem:[%s5] sm:$0xf]
  %v285 = vpack.c.bf16 %v277, %v276
  %v286 = vpack.c.bf16 %v279, %v278
  %v287 = vpack.c.bf16 %v281, %v280
  %v288 = vpack.c.bf16 %v283, %v282
  %v289 = vld [vmem:[%s6] sm:$0xff]
  %291 = vset.pattern.permute.xlu0 0
  %292 = vperm.xlu0 %291, %v289
  %v293 = vpop.permute.xlu0 %292
  %vm295 = vcmask 523264
  %v297 = vsel %vm295, %v284, 0
  %299 = vmatprep.subr.bf16.mxu0 0
  %300 = vmatpush1.bf16.msra.mxu0 0
  %301 = vmatprep.subr.bf16.mxu0 0
  %302 = vmatpush1.bf16.msra.mxu0 0
  %303 = vmatprep.subr.bf16.mxu0 0
  %304 = vmatpush1.bf16.msra.mxu0 0
  %305 = vmatprep.subr.bf16.mxu0 0
  %306 = vmatpush1.bf16.msra.mxu0 0
  %307 = vmatprep.subr.bf16.mxu0 0
  %308 = vmatpush1.bf16.msra.mxu0 %v288
  %309 = vmatprep.subr.bf16.mxu0 0
  %310 = vmatpush1.bf16.msra.mxu0 %v287
  %311 = vmatprep.subr.bf16.mxu0 0
  %312 = vmatpush1.bf16.msra.mxu0 %v286
  %313 = vmatprep.subr.bf16.mxu0 0
  %314 = vmatpush1.bf16.msra.mxu0 %v285
  %315 = vmatprep.subr.bf16.mxu0 0
  %316 = vmatpush2.bf16.msra.mxu0 0
  %317 = vmatprep.subr.bf16.mxu0 0
  %318 = vmatpush2.bf16.msra.mxu0 0
  %319 = vmatprep.subr.bf16.mxu0 0
  %320 = vmatpush2.bf16.msra.mxu0 0
  %321 = vmatprep.subr.bf16.mxu0 0
  %322 = vmatpush2.bf16.msra.mxu0 0
  %323 = vmatprep.subr.bf16.mxu0 0
  %324 = vmatpush2.bf16.msra.mxu0 0
  %325 = vmatprep.subr.bf16.mxu0 0
  %326 = vmatpush2.bf16.msra.mxu0 0
  %327 = vmatprep.subr.bf16.mxu0 0
  %328 = vmatpush2.bf16.msra.mxu0 0
  %329 = vmatprep.subr.bf16.mxu0 0
  %330 = vmatpush2.bf16.msra.mxu0 0
  %331 = vmatprep.mubr.bf16.mxu0 0
  %332 = vmatmul.mubr.bf16.gmra.mxu0 %v297
  %v333 = vpop.f32.mrf.mxu0
  %v334 = vadd.f32 %v293, %v333
  %v335 = vpop.f32.mrf.mxu0
  %v336 = vpop.f32.mrf.mxu0
  %v337 = vpop.f32.mrf.mxu0
  %338 = vdwg.mxu0
  %339 = vst [vmem:[%s8] sm:$0xff] %v334
  // Predicated region
  $region30: #{domain_invariant_forward.1} parent=0 // pred_check
    _
  $region31: #{domain_invariant_forward.1} parent=0 // pred_check_branch
    %341 = sbr.rel (0) target = $region33
  $region32: #{domain_invariant_forward.1} parent=0 // pred_region
    _
  $region33: #{domain_invariant_forward.1} parent=0 // pred_fallthru
    _
  // Predicated region
  $region34: #{domain_invariant_forward.1} parent=0 // pred_check
    _
  $region35: #{domain_invariant_forward.1} parent=0 // pred_check_branch
    %343 = sbr.rel (0) target = $region37
  $region36: #{domain_invariant_forward.1} parent=0 // pred_region
    _
  $region37: #{domain_invariant_forward.1} parent=0 // pred_fallthru
    _
  // Predicated region
  $region38: #{domain_invariant_forward.1} parent=0 // pred_check
    _
  $region39: #{domain_invariant_forward.1} parent=0 // pred_check_branch
    %345 = sbr.rel (0) target = $region41
  $region40: #{domain_invariant_forward.1} parent=0 // pred_region
    _
  $region41: #{domain_invariant_forward.1} parent=0 // pred_fallthru
    _
  // Predicated region
  $region42: #{domain_invariant_forward.1} parent=0 // pred_check
    _
  $region43: #{domain_invariant_forward.1} parent=0 // pred_check_branch
    %347 = sbr.rel (0) target = $region45
  $region44: #{domain_invariant_forward.1} parent=0 // pred_region
    _
  $region45: #{domain_invariant_forward.1} parent=0 // pred_fallthru
    _

</llo_original>
